<compile_context>
chip_gen: v7x
topology: tpu7x:2x2x1
jax: 0.10.0
libtpu: 0.0.40
codegen_flags: <defaults>
</compile_context>

<pallas_src>
import jax
import jax.numpy as jnp
from jax import lax
from jax.experimental import pallas as pl
from jax.experimental.pallas import tpu as pltpu


_EPS = 1e-12
_ROWS_PER_STEP = 8     # rows gathered per grid step -> one dense (8, 128k) output tile
_LANE = 128


def _round_up(x, m):
    return ((x + m - 1) // m) * m


def _vmem_limit(requested_bytes):
    """Clamp a scoped-VMEM request to ~3/4 of this chip's physical VMEM."""
    try:
        cap = pltpu.get_tpu_info().vmem_capacity_bytes
    except Exception:                      # pragma: no cover - interpret / old jax
        cap = 64 * (1 << 20)
    return int(min(max(int(requested_bytes), 16 << 20), (cap * 3) // 4))


# ---------------------------------------------------------------------------
# Kernel A: one power-iteration step + 1/sigma.
# Two GEMVs (negligible work) hoisted out of the gather kernel so the gather
# grid axis can be "parallel".
# ---------------------------------------------------------------------------
def _sigma_kernel(u_ref, w_ref, unew_ref, inv_sigma_ref):
    w = w_ref[...]                                   # native dtype (no f32 copy of W)
    u = u_ref[...].astype(w.dtype)                   # keep MXU inputs in W's dtype
    v = jnp.dot(u, w, preferred_element_type=jnp.float32)                # (1, D)
    v = v / (jnp.sqrt(jnp.sum(v * v)) + _EPS)
    # z = v @ W^T without materializing W^T: contract over W's dim 1.
    z = lax.dot_general(v.astype(w.dtype), w, (((1,), (1,)), ((), ())),
                        preferred_element_type=jnp.float32)              # (1, N)
    zz = jnp.sum(z * z)
    zn = jnp.sqrt(zz) + _EPS
    unew_ref[...] = (z / zn).astype(unew_ref.dtype)
    # sigma = sum((u_new @ W) * v) == ||z||^2 / (||z|| + eps); store 1/sigma.
    # max() guards a degenerate all-zero z (avoids inf/NaN downstream).
    inv_sigma_ref[0, 0] = zn / jnp.maximum(zz, 1e-30)


def _power_iteration(weight, u):
    N, D = weight.shape
    w_bytes = int(weight.size) * weight.dtype.itemsize
    u_new, inv_sigma = pl.pallas_call(
        _sigma_kernel,
        out_shape=(
            jax.ShapeDtypeStruct((1, N), u.dtype),       # u_new (aliased onto u)
            jax.ShapeDtypeStruct((1, 1), jnp.float32),   # 1 / sigma
        ),
        in_specs=[
            pl.BlockSpec(memory_space=pltpu.MemorySpace.VMEM),   # u  (tiny)
            pl.BlockSpec(memory_space=pltpu.MemorySpace.VMEM),   # W  (full, once)
        ],
        out_specs=(
            pl.BlockSpec(memory_space=pltpu.MemorySpace.VMEM),
            pl.BlockSpec(memory_space=pltpu.MemorySpace.SMEM),
        ),
        # In-place buffer update (mirrors PyTorch `self.u.copy_(_u)`); the input
        # u array is donated and must not be reused by the caller afterwards.
        input_output_aliases={0: 0},
        compiler_params=pltpu.CompilerParams(
            vmem_limit_bytes=_vmem_limit(w_bytes + (4 << 20)),
        ),
        cost_estimate=pl.CostEstimate(
            flops=4 * N * D,
            transcendentals=2,
            bytes_accessed=w_bytes + 3 * N * u.dtype.itemsize,
        ),
    )(u, weight)
    # TODO(synk): for tables larger than VMEM, tile this kernel over N
    # (accumulate the two GEMVs); not needed at these sizes.
    return u_new, inv_sigma


# ---------------------------------------------------------------------------
# Kernel B: gather + scale.
# Indices are scalar-prefetched into SMEM and drive data-dependent pl.Element
# row index_maps, so Pallas DMAs only the needed rows of W (HBM -> VMEM) per
# grid step.  The body is just a scale + dense lane-aligned store.
# ---------------------------------------------------------------------------
def _gather_scale_kernel(idx_ref, inv_sigma_ref, *refs):
    del idx_ref                       # indices are consumed by the index_maps
    *w_rows, out_ref = refs           # R single-row views of W, then the output tile
    inv_s = inv_sigma_ref[0, 0]
    d = out_ref.shape[-1]
    for r, w_r in enumerate(w_rows):  # static unroll: R dense (1, d) stores
        row = (w_r[...].astype(jnp.float32) * inv_s).reshape(1, d)
        out_ref[pl.ds(r, 1), :] = row.astype(out_ref.dtype)


def sn_embedding(indices, weight, u, *, rows_per_step=_ROWS_PER_STEP):
    """SNEmbedding forward.

    indices: int array of any shape; weight: (N, D); u: (1, N).
    Returns (out[..., D], u_new).  NOTE: `u` is donated (aliased to u_new); do
    not reuse the input `u` array after this call.
    """
    N, D = weight.shape
    out_dtype = weight.dtype
    itemsize = jnp.dtype(out_dtype).itemsize

    # ---- power iteration + 1/sigma (tiny separate kernel) ----
    u_new, inv_sigma = _power_iteration(weight, u)

    # ---- lane-dense view of W for the gather (pad D up to a multiple of 128) ----
    D_pad = _round_up(D, _LANE)
    w_gather = weight if D_pad == D else jnp.pad(weight, ((0, 0), (0, D_pad - D)))
    # TODO(synk): in a real model store W already D-padded so this pad copy is
    # not paid on every forward call.

    # ---- flatten / clamp / pad the indices (they live in SMEM via prefetch) ----
    # NOTE: PyTorch raises on out-of-range ids; we clamp instead (documented).
    flat_idx = jnp.clip(indices.reshape(-1).astype(jnp.int32), 0, N - 1)
    T = flat_idx.shape[0]
    R = int(rows_per_step)
    T_pad = _round_up(max(T, R), R)
    idx_pad = jnp.zeros((T_pad,), jnp.int32).at[:T].set(flat_idx)
    grid = (T_pad // R,)

    def _row_spec(r):
        # Element-offset row gather: Pallas DMAs exactly row idx[i*R + r] of W
        # from HBM for grid step i; W is never resident in VMEM.
        return pl.BlockSpec((pl.Element(1), D_pad),
                            lambda i, idx_ref, r=r: (idx_ref[i * R + r], 0))

    out_pad = pl.pallas_call(
        _gather_scale_kernel,
        out_shape=jax.ShapeDtypeStruct((T_pad, D_pad), out_dtype),
        grid_spec=pltpu.PrefetchScalarGridSpec(
            num_scalar_prefetch=1,                       # idx -> SMEM, drives index_maps
            grid=grid,
            in_specs=[pl.BlockSpec(memory_space=pltpu.MemorySpace.SMEM)]   # 1/sigma
                     + [_row_spec(r) for r in range(R)],                   # R rows of W
            out_specs=pl.BlockSpec((R, D_pad), lambda i, idx_ref: (i, 0)),
        ),
        compiler_params=pltpu.CompilerParams(
            # sigma is precomputed, so grid steps are independent -> "parallel"
            # lets Mosaic shard them across v7x's two TensorCores.
            dimension_semantics=("parallel",),
            vmem_limit_bytes=_vmem_limit(16 << 20),
        ),
        cost_estimate=pl.CostEstimate(
            flops=T_pad * D_pad,
            transcendentals=0,
            bytes_accessed=2 * T_pad * D_pad * itemsize + 4 * T_pad + 4,
        ),
    )(idx_pad, inv_sigma, *([w_gather] * R))
    # TODO(synk): on v5e with very large T it can be cheaper to keep W resident
    # in VMEM (128 MiB) and gather on-chip / batch multiple rows per DMA instead
    # of issuing per-row HBM copies.

    out = out_pad[:T, :D].reshape(indices.shape + (D,))
    return out, u_new


# ---------------------------------------------------------------------------
# Pure-JAX reference (mirrors the PyTorch module's forward with Ip=1).
# ---------------------------------------------------------------------------
def _reference(indices, weight, u, eps=1e-12):
    v = u @ weight
    v = v / (jnp.linalg.norm(v) + eps)
    u_new = v @ weight.T
    u_new = u_new / (jnp.linalg.norm(u_new) + eps)
    sigma = jnp.sum((u_new @ weight) * v)
    w_bar = weight / sigma
    return w_bar[indices], u_new


if __name__ == "__main__":
    num_embeddings, embedding_dim = 16, 32
    batch, seq = 2, 8

    key = jax.random.PRNGKey(0)
    k_w, k_u, k_i = jax.random.split(key, 3)

    # Parameter init mirrors reset_parameters(): weight ~ N(0, 1); u ~ N(0, 1).
    weight = jax.random.normal(k_w, (num_embeddings, embedding_dim), jnp.float32)
    u_buf = jax.random.normal(k_u, (1, num_embeddings), jnp.float32)
    indices = jax.random.randint(k_i, (batch, seq), 0, num_embeddings, jnp.int32)
    # TODO(synk): padding_idx / max_norm / scale_grad_by_freq / sparse only affect
    # init or the backward pass; the forward with defaults needs none of them.

    # Compute the reference before the kernel call (u_buf is donated via aliasing).
    ref_out, ref_u = _reference(indices, weight, u_buf)
    ref_out = jax.block_until_ready(ref_out)

    out, u_new = sn_embedding(indices, weight, u_buf)
    out = jax.block_until_ready(out)
    u_new = jax.block_until_ready(u_new)

    assert out.shape == (batch, seq, embedding_dim)
    assert jnp.allclose(out, ref_out, atol=1e-5, rtol=1e-5)
    assert jnp.allclose(u_new, ref_u, atol=1e-5, rtol=1e-5)

    print("KERNEL_OK")
</pallas_src>

<mosaic_0001>
module attributes {stable_mosaic.version = 11 : i64} {
  func.func @_sigma_kernel(%arg0: memref<1x16xf32, #tpu.memory_space<vmem>>, %arg1: memref<16x32xf32, #tpu.memory_space<vmem>>, %arg2: memref<1x16xf32, #tpu.memory_space<vmem>>, %arg3: memref<1x1xf32, #tpu.memory_space<smem>>) attributes {dimension_semantics = [], scalar_prefetch = 0 : i64, scratch_operands = 0 : i64, tpu.core_type = #tpu.core_type<tc>} {
    %c0 = arith.constant 0 : index
    %c0_0 = arith.constant 0 : index
    %0 = vector.load %arg1[%c0, %c0_0] : memref<16x32xf32, #tpu.memory_space<vmem>>, vector<16x32xf32>
    %c0_1 = arith.constant 0 : index
    %c0_2 = arith.constant 0 : index
    %1 = vector.load %arg0[%c0_1, %c0_2] : memref<1x16xf32, #tpu.memory_space<vmem>>, vector<1x16xf32>
    %cst = arith.constant dense<0.000000e+00> : vector<1x32xf32>
    %2 = tpu.matmul %1, %0, %cst {dimension_numbers = #tpu.dot_dimension_numbers<[1], [0], [0], [1], [0, 0, 1, 1], [], []>} : vector<1x16xf32>, vector<16x32xf32>, vector<1x32xf32> -> vector<1x32xf32>
    %3 = arith.mulf %2, %2 : vector<1x32xf32>
    %4 = vector.shape_cast %3 : vector<1x32xf32> to vector<1x1x32xf32>
    %cst_3 = arith.constant dense<0.000000e+00> : vector<1xf32>
    %5 = vector.multi_reduction <add>, %4, %cst_3 [1, 2] : vector<1x1x32xf32> to vector<1xf32>
    %6 = vector.shape_cast %5 : vector<1xf32> to vector<1x1x1xf32>
    %7 = vector.extract %6[0, 0, 0] : f32 from vector<1x1x1xf32>
    %8 = math.sqrt %7 : f32
    %cst_4 = arith.constant 9.99999996E-13 : f32
    %9 = arith.addf %8, %cst_4 : f32
    %10 = vector.broadcast %9 : f32 to vector<1x32xf32>
    %11 = arith.divf %2, %10 : vector<1x32xf32>
    %cst_5 = arith.constant dense<0.000000e+00> : vector<1x16xf32>
    %12 = tpu.matmul %11, %0, %cst_5 {dimension_numbers = #tpu.dot_dimension_numbers<[1], [1], [0], [0], [0, 0, 1, 0], [], []>} : vector<1x32xf32>, vector<16x32xf32>, vector<1x16xf32> -> vector<1x16xf32>
    %13 = arith.mulf %12, %12 : vector<1x16xf32>
    %14 = vector.shape_cast %13 : vector<1x16xf32> to vector<1x1x16xf32>
    %cst_6 = arith.constant dense<0.000000e+00> : vector<1xf32>
    %15 = vector.multi_reduction <add>, %14, %cst_6 [1, 2] : vector<1x1x16xf32> to vector<1xf32>
    %16 = vector.shape_cast %15 : vector<1xf32> to vector<1x1x1xf32>
    %17 = vector.extract %16[0, 0, 0] : f32 from vector<1x1x1xf32>
    %18 = math.sqrt %17 : f32
    %cst_7 = arith.constant 9.99999996E-13 : f32
    %19 = arith.addf %18, %cst_7 : f32
    %20 = vector.broadcast %19 : f32 to vector<1x16xf32>
    %21 = arith.divf %12, %20 : vector<1x16xf32>
    %c0_8 = arith.constant 0 : index
    %c0_9 = arith.constant 0 : index
    %22 = vector.load %arg2[%c0_8, %c0_9] : memref<1x16xf32, #tpu.memory_space<vmem>>, vector<1x16xf32>
    tpu.vector_store %arg2[%c0_8, %c0_9], %21 {strides = array<i32>} : memref<1x16xf32, #tpu.memory_space<vmem>>, vector<1x16xf32>,
    %cst_10 = arith.constant 1.000000e-30 : f32
    %23 = arith.maximumf %17, %cst_10 : f32
    %24 = arith.divf %19, %23 : f32
    %c0_11 = arith.constant 0 : index
    %c0_12 = arith.constant 0 : index
    %25 = memref.load %arg3[%c0_11, %c0_12] : memref<1x1xf32, #tpu.memory_space<smem>>
    memref.store %24, %arg3[%c0_11, %c0_12] : memref<1x1xf32, #tpu.memory_space<smem>>
    return
  }
}

</mosaic_0001>

<llo_original>
// kernel: tpu_custom_call.1
$region0: #{tpu_custom_call.1}
  #allocation0 [shape = 'u32[]', space=smem, size = 0x4, offset = 0x4, fixed_abs, tag = 'smem constant byte address 0x4 - core index']
  #allocation1 [shape = 'u32[144,128]{1,0:T(1,128)}', space=vmem, size = 0x12000, scoped, tag = 'internal scratch']
  %s0 = inlined_call_operand.hbm [shape: f32[1,16], index: 0, kind: input, shape index: {}, may-alias: {0,2}]
  %s1 = inlined_call_operand.hbm [shape: f32[16,32], index: 1, kind: input, shape index: {}]
  %s2 = inlined_call_operand.hbm [shape: f32[1,16], index: 2, kind: output, shape index: {0}, may-alias: {0,2}]
  %s3 = inlined_call_operand.hbm [shape: f32[1,1], index: 3, kind: output, shape index: {1}]
  %4 = xla_tuple %s2, %s3
  %s5 = sld [smem:[#allocation0]]
  $region34: #{tpu_custom_call.1} parent=0
    _
  %s7 = ssub.s32 1, %s5
  %s8 = scalar_select 0, %s7, %s5
  $region1: #{tpu_custom_call.1} parent=0
    #allocation2 [shape = 'u8[512]{0}', space=vmem, size = 0x400, scoped, tag = 'input window, operand 0, single buffered']
    #allocation3 [shape = 's32[1]{0}', space=sflag, size = 0x4, scoped, tag = 'scoped memory for tpu_custom_call.1']
    #allocation4 [shape = 's32[1]{0}', space=sflag, size = 0x4, scoped, tag = 'scoped memory for tpu_custom_call.1']
    #allocation5 [shape = 's32[1]{0}', space=sflag, size = 0x4, scoped, tag = 'scoped memory for tpu_custom_call.1']
    #allocation6 [shape = 'u8[8192]{0}', space=vmem, size = 0x2000, scoped, tag = 'input window, operand 1, single buffered']
    #allocation7 [shape = 's32[1]{0}', space=sflag, size = 0x4, scoped, tag = 'scoped memory for tpu_custom_call.1']
    #allocation8 [shape = 'u8[512]{0}', space=vmem, size = 0x400, scoped, tag = 'output window, operand 0, single buffered']
    #allocation9 [shape = 'u8[512]{0}', space=smem, size = 0x200, scoped, tag = 'output window, operand 1, single buffered']
    %9 = vsyncpa [#allocation3], 0
    %10 = vsyncpa [#allocation7], 0
    %11 = vsyncpa [#allocation4], 0
    %12 = vsyncpa [#allocation5], 0
    // Predicated region
    $region2: #{tpu_custom_call.1} parent=1 // pred_check
      _
    $region3: #{tpu_custom_call.1} parent=1 // pred_check_branch
      %14 = sbr.rel (0) target = $region5
    $region4: #{tpu_custom_call.1} parent=1 // pred_region
      %s16 = ssub.s32 16, 16
      %17 = vsyncadd [#allocation3], %s16
      %s19 = sshll.u32 [#allocation2], 4
      %s20 = int_to_ptr.vmem [resolvable:$true] %s19
      %22 = dma.hbm_to_vmem [thread:$0]  %s0, 16, %s20, [#allocation3]
    $region5: #{tpu_custom_call.1} parent=1 // pred_fallthru
      _
    // Predicated region
    $region6: #{tpu_custom_call.1} parent=1 // pred_check
      _
    $region7: #{tpu_custom_call.1} parent=1 // pred_check_branch
      %24 = sbr.rel (0) target = $region9
    $region8: #{tpu_custom_call.1} parent=1 // pred_region
      %s26 = ssub.s32 256, 256
      %27 = vsyncadd [#allocation7], %s26
      %s28 = sshll.u32 [#allocation6], 4
      %s29 = int_to_ptr.vmem [resolvable:$true] %s28
      %34 = dma.hbm_to_vmem [thread:$0]  %s1, 256, %s29, [#allocation7], 128, 128, 8
    $region9: #{tpu_custom_call.1} parent=1 // pred_fallthru
      _
    // Predicated region
    $region10: #{tpu_custom_call.1} parent=1 // pred_check
      _
    $region11: #{tpu_custom_call.1} parent=1 // pred_check_branch
      %36 = sbr.rel (0) target = $region13
    $region12: #{tpu_custom_call.1} parent=1 // pred_region
      %37 = dma.done [#allocation3], 16
    $region13: #{tpu_custom_call.1} parent=1 // pred_fallthru
      _
    // Predicated region
    $region14: #{tpu_custom_call.1} parent=1 // pred_check
      _
    $region15: #{tpu_custom_call.1} parent=1 // pred_check_branch
      %39 = sbr.rel (0) target = $region17
    $region16: #{tpu_custom_call.1} parent=1 // pred_region
      %40 = dma.done [#allocation7], 256
    $region17: #{tpu_custom_call.1} parent=1 // pred_fallthru
      _
    %v41 = vld [vmem:[#allocation6] sm:$0xff]
    %v42 = vld [vmem:[#allocation6 + $0x8] sm:$0xff]
    %v43 = vld [vmem:[#allocation2] sm:$0x1]
    %vm44 = vcmask 130048
    %v46 = vsel %vm44, %v43, 0
    %48 = vmatprep.subr.mxu0 0.0
    %49 = vmatpush1.msra.mxu0 %v41
    %50 = vmatprep.subr.mxu0 0.0
    %51 = vmatpush1.msra.mxu0 %v42
    %52 = vmatprep.subr.mxu0 0.0
    %53 = vmatpush1.msra.mxu0 0.0
    %54 = vmatprep.subr.mxu0 0.0
    %55 = vmatpush1.msra.mxu0 0.0
    %56 = vmatprep.subr.mxu0 0.0
    %57 = vmatpush1.msra.mxu0 0.0
    %58 = vmatprep.subr.mxu0 0.0
    %59 = vmatpush1.msra.mxu0 0.0
    %60 = vmatprep.subr.mxu0 0.0
    %61 = vmatpush1.msra.mxu0 0.0
    %62 = vmatprep.subr.mxu0 0.0
    %63 = vmatpush1.msra.mxu0 0.0
    %64 = vmatprep.subr.mxu0 0.0
    %65 = vmatpush1.msra.mxu0 0.0
    %66 = vmatprep.subr.mxu0 0.0
    %67 = vmatpush1.msra.mxu0 0.0
    %68 = vmatprep.subr.mxu0 0.0
    %69 = vmatpush1.msra.mxu0 0.0
    %70 = vmatprep.subr.mxu0 0.0
    %71 = vmatpush1.msra.mxu0 0.0
    %72 = vmatprep.subr.mxu0 0.0
    %73 = vmatpush1.msra.mxu0 0.0
    %74 = vmatprep.subr.mxu0 0.0
    %75 = vmatpush1.msra.mxu0 0.0
    %76 = vmatprep.subr.mxu0 0.0
    %77 = vmatpush1.msra.mxu0 0.0
    %78 = vmatprep.subr.mxu0 0.0
    %79 = vmatpush1.msra.mxu0 0.0
    %80 = vmatprep.subr.mxu0 0.0
    %81 = vmatpush1.msra.mxu0 0.0
    %82 = vmatprep.subr.mxu0 0.0
    %83 = vmatpush1.msra.mxu0 0.0
    %84 = vmatprep.subr.mxu0 0.0
    %85 = vmatpush1.msra.mxu0 0.0
    %86 = vmatprep.subr.mxu0 0.0
    %87 = vmatpush1.msra.mxu0 0.0
    %88 = vmatprep.subr.mxu0 0.0
    %89 = vmatpush1.msra.mxu0 0.0
    %90 = vmatprep.subr.mxu0 0.0
    %91 = vmatpush1.msra.mxu0 0.0
    %92 = vmatprep.subr.mxu0 0.0
    %93 = vmatpush1.msra.mxu0 0.0
    %94 = vmatprep.subr.mxu0 0.0
    %95 = vmatpush1.msra.mxu0 0.0
    %96 = vmatprep.subr.mxu0 0.0
    %97 = vmatpush1.msra.mxu0 0.0
    %98 = vmatprep.subr.mxu0 0.0
    %99 = vmatpush1.msra.mxu0 0.0
    %100 = vmatprep.subr.mxu0 0.0
    %101 = vmatpush1.msra.mxu0 0.0
    %102 = vmatprep.subr.mxu0 0.0
    %103 = vmatpush1.msra.mxu0 0.0
    %104 = vmatprep.subr.mxu0 0.0
    %105 = vmatpush1.msra.mxu0 0.0
    %106 = vmatprep.subr.mxu0 0.0
    %107 = vmatpush1.msra.mxu0 0.0
    %108 = vmatprep.subr.mxu0 0.0
    %109 = vmatpush1.msra.mxu0 0.0
    %110 = vmatprep.subr.mxu0 0.0
    %111 = vmatpush1.msra.mxu0 0.0
    %112 = vmatprep.mubr.f32.mxu0 0.0
    %113 = vmatmul.mubr.f32.gmra.mrb[0].mxu0 %v46
    %v114 = vpop.f32.mrb[0].mxu0
    %v115 = vadd.f32 0.0, %v114
    %v116 = vpop.f32.mrb[0].mxu0
    %117 = vdwg.mxu0
    %v118 = vmul.f32 %v115, %v115
    %vm119 = vcmask 253952
    %v120 = vsel %vm119, %v118, 0.0
    %121 = vadd.xlane.f32.xlu0 %v120
    %v122 = vpop.xlane.xlu0 %121
    %v123 = vrot.slane %v122, 4
    %v124 = vadd.f32 %v122, %v123
    %v125 = vrot.slane %v124, 2
    %v126 = vadd.f32 %v124, %v125
    %v127 = vrot.slane %v126, 1
    %v128 = vadd.f32 %v126, %v127
    %s129 = vtos %v128
    %v130 = vstv %s129
    %v131 = vrsqrt.pop %v130
    %v132 = vmul.f32 %v130, %v131
    %vm133 = vcmp.eq.f32.partialorder %v130, inf
    %v134 = vsel %vm133, %v130, %v132
    %vm135 = vcmp.eq.f32.partialorder %v130, 0.0
    %v136 = vand.u32 %v130, 2147483648
    %v137 = vsel %vm135, %v136, %v134
    %s138 = vtos %v137
    %s139 = sadd.f32 %s138, 1e-12
    %v140 = vstv %s139
    %v141 = vrcp.pop %v140
    %v142 = vmul.f32 %v115, %v141
    %vm143 = vcmask 261120
    %v145 = vsel %vm143, %v142, 0
    %v148 = vsel %vm143, %v41, 0
    %v151 = vsel %vm143, %v42, 0
    %153 = vmatprep.subr.mxu0 0.0
    %154 = vmatpush1.xpose.msra.mxu0 %v148
    %155 = vmatprep.subr.mxu0 0.0
    %156 = vmatpush1.xpose.msra.mxu0 %v151
    %157 = vmatprep.subr.mxu0 0.0
    %158 = vmatpush1.xpose.msra.mxu0 0.0
    %159 = vmatprep.subr.mxu0 0.0
    %160 = vmatpush1.xpose.msra.mxu0 0.0
    %161 = vmatprep.subr.mxu0 0.0
    %162 = vmatpush1.xpose.msra.mxu0 0.0
    %163 = vmatprep.subr.mxu0 0.0
    %164 = vmatpush1.xpose.msra.mxu0 0.0
    %165 = vmatprep.subr.mxu0 0.0
    %166 = vmatpush1.xpose.msra.mxu0 0.0
    %167 = vmatprep.subr.mxu0 0.0
    %168 = vmatpush1.xpose.msra.mxu0 0.0
    %169 = vmatprep.subr.mxu0 0.0
    %170 = vmatpush1.xpose.msra.mxu0 0.0
    %171 = vmatprep.subr.mxu0 0.0
    %172 = vmatpush1.xpose.msra.mxu0 0.0
    %173 = vmatprep.subr.mxu0 0.0
    %174 = vmatpush1.xpose.msra.mxu0 0.0
    %175 = vmatprep.subr.mxu0 0.0
    %176 = vmatpush1.xpose.msra.mxu0 0.0
    %177 = vmatprep.subr.mxu0 0.0
    %178 = vmatpush1.xpose.msra.mxu0 0.0
    %179 = vmatprep.subr.mxu0 0.0
    %180 = vmatpush1.xpose.msra.mxu0 0.0
    %181 = vmatprep.subr.mxu0 0.0
    %182 = vmatpush1.xpose.msra.mxu0 0.0
    %183 = vmatprep.subr.mxu0 0.0
    %184 = vmatpush1.xpose.msra.mxu0 0.0
    %185 = vmatprep.subr.mxu0 0.0
    %186 = vmatpush1.xpose.msra.mxu0 0.0
    %187 = vmatprep.subr.mxu0 0.0
    %188 = vmatpush1.xpose.msra.mxu0 0.0
    %189 = vmatprep.subr.mxu0 0.0
    %190 = vmatpush1.xpose.msra.mxu0 0.0
    %191 = vmatprep.subr.mxu0 0.0
    %192 = vmatpush1.xpose.msra.mxu0 0.0
    %193 = vmatprep.subr.mxu0 0.0
    %194 = vmatpush1.xpose.msra.mxu0 0.0
    %195 = vmatprep.subr.mxu0 0.0
    %196 = vmatpush1.xpose.msra.mxu0 0.0
    %197 = vmatprep.subr.mxu0 0.0
    %198 = vmatpush1.xpose.msra.mxu0 0.0
    %199 = vmatprep.subr.mxu0 0.0
    %200 = vmatpush1.xpose.msra.mxu0 0.0
    %201 = vmatprep.subr.mxu0 0.0
    %202 = vmatpush1.xpose.msra.mxu0 0.0
    %203 = vmatprep.subr.mxu0 0.0
    %204 = vmatpush1.xpose.msra.mxu0 0.0
    %205 = vmatprep.subr.mxu0 0.0
    %206 = vmatpush1.xpose.msra.mxu0 0.0
    %207 = vmatprep.subr.mxu0 0.0
    %208 = vmatpush1.xpose.msra.mxu0 0.0
    %209 = vmatprep.subr.mxu0 0.0
    %210 = vmatpush1.xpose.msra.mxu0 0.0
    %211 = vmatprep.subr.mxu0 0.0
    %212 = vmatpush1.xpose.msra.mxu0 0.0
    %213 = vmatprep.subr.mxu0 0.0
    %214 = vmatpush1.xpose.msra.mxu0 0.0
    %215 = vmatprep.subr.mxu0 0.0
    %216 = vmatpush1.xpose.msra.mxu0 0.0
    %217 = vmatprep.mubr.f32.mxu0 0.0
    %218 = vmatmul.mubr.f32.gmra.mrb[0].mxu0 %v145
    %v219 = vpop.f32.mrb[0].mxu0
    %v220 = vadd.f32 0.0, %v219
    %v221 = vpop.f32.mrb[0].mxu0
    %222 = vdwg.mxu0
    %v223 = vmul.f32 %v220, %v220
    %vm224 = vcmask 122880
    %v225 = vsel %vm224, %v223, 0.0
    %226 = vadd.xlane.f32.xlu0 %v225
    %v227 = vpop.xlane.xlu0 %226
    %v228 = vrot.slane %v227, 4
    %v229 = vadd.f32 %v227, %v228
    %v230 = vrot.slane %v229, 2
    %v231 = vadd.f32 %v229, %v230
    %v232 = vrot.slane %v231, 1
    %v233 = vadd.f32 %v231, %v232
    %s234 = vtos %v233
    %v235 = vstv %s234
    %v236 = vrsqrt.pop %v235
    %v237 = vmul.f32 %v235, %v236
    %vm238 = vcmp.eq.f32.partialorder %v235, inf
    %v239 = vsel %vm238, %v235, %v237
    %vm240 = vcmp.eq.f32.partialorder %v235, 0.0
    %v241 = vand.u32 %v235, 2147483648
    %v242 = vsel %vm240, %v241, %v239
    %s243 = vtos %v242
    %s244 = sadd.f32 %s243, 1e-12
    %v245 = vstv %s244
    %v246 = vrcp.pop %v245
    %v247 = vmul.f32 %v220, %v246
    %248 = vst.msk [vmem:[#allocation8] sm:$0x1] %vm224, %v247
    %s249 = smax.f32 %s234, 1e-30
    %v250 = vstv %s249
    %v251 = vrcp.pop %v250
    %s252 = vtos %v251
    %s253 = smul.f32 %s244, %s252
    %s254 = scalar_lea.smem [#allocation9], 0
    %255 = sst [smem:[%s254]] %s253
    // Predicated region
    $region18: #{tpu_custom_call.1} parent=1 // pred_check
      _
    $region19: #{tpu_custom_call.1} parent=1 // pred_check_branch
      %257 = sbr.rel (0) target = $region21
    $region20: #{tpu_custom_call.1} parent=1 // pred_region
      %s259 = ssub.s32 16, 16
      %260 = vsyncadd [#allocation4], %s259
      %s262 = sshll.u32 [#allocation8], 4
      %s263 = int_to_ptr.vmem [resolvable:$true] %s262
      %265 = dma.vmem_to_hbm [thread:$0]  %s263, 16, %s2, [#allocation4]
    $region21: #{tpu_custom_call.1} parent=1 // pred_fallthru
      _
    // Predicated region
    $region22: #{tpu_custom_call.1} parent=1 // pred_check
      _
    $region23: #{tpu_custom_call.1} parent=1 // pred_check_branch
      %267 = sbr.rel (0) target = $region25
    $region24: #{tpu_custom_call.1} parent=1 // pred_region
      %s269 = ssub.s32 16, 16
      %270 = vsyncadd [#allocation5], %s269
      %273 = dma.smem_to_hbm [#allocation9], 16, %s3, [#allocation5]
    $region25: #{tpu_custom_call.1} parent=1 // pred_fallthru
      _
    // Predicated region
    $region26: #{tpu_custom_call.1} parent=1 // pred_check
      _
    $region27: #{tpu_custom_call.1} parent=1 // pred_check_branch
      %275 = sbr.rel (0) target = $region29
    $region28: #{tpu_custom_call.1} parent=1 // pred_region
      %276 = dma.done [#allocation4], 16
    $region29: #{tpu_custom_call.1} parent=1 // pred_fallthru
      _
    // Predicated region
    $region30: #{tpu_custom_call.1} parent=1 // pred_check
      _
    $region31: #{tpu_custom_call.1} parent=1 // pred_check_branch
      %278 = sbr.rel (0) target = $region33
    $region32: #{tpu_custom_call.1} parent=1 // pred_region
      %279 = dma.done [#allocation5], 16
    $region33: #{tpu_custom_call.1} parent=1 // pred_fallthru
      _
    %280 = sfence
    %281 = vsyncpa [#allocation3], 1
    %282 = vsyncpa [#allocation7], 1
    %283 = vsyncpa [#allocation4], 1
    %284 = vsyncpa [#allocation5], 1

</llo_original>
